<compile_context>
chip_gen: v7x
topology: tpu7x:2x2x1
jax: 0.10.0
libtpu: 0.0.40
codegen_flags: <defaults>
</compile_context>

<pallas_src>
import functools

import jax
import jax.numpy as jnp
from jax.experimental import pallas as pl
from jax.experimental.pallas import tpu as pltpu

_LANE = 128


def _round_up(n, m):
    return ((n + m - 1) // m) * m


def _cdiv(a, b):
    return -(-a // b)


def _normalizer_kernel(x_ref, mean_ref, inv_ref, o_ref, *, use_mean, use_scale):
    # x_ref / o_ref     : (TILE_R, TILE_L)  -- rows = flattened (batch, channel)
    # mean_ref / inv_ref: (TILE_R, 1)       -- per-row parameters (inv = 1/std)
    x = x_ref[...]
    if use_mean:
        x = x - mean_ref[...]
    if use_scale:
        x = x * inv_ref[...]
    o_ref[...] = x


def _chip_plan():
    """Return (target_block_bytes, vmem_limit_bytes_or_None, num_tensorcores)."""
    kind = ""
    try:
        kind = jax.devices()[0].device_kind.lower()
    except Exception:  # pragma: no cover - defensive, e.g. interpret mode
        pass
    if "v7" in kind or "7x" in kind:
        # 64 MiB VMEM / TC, 3.2 TB/s HBM: big blocks amortize per-step cost.
        return 8 << 20, 48 << 20, 2
    if "v6" in kind:
        # 32 MiB scoped-VMEM default: 4 MiB blocks double-buffered in+out fit.
        return 4 << 20, None, 1
    # v5e (16 MiB scoped default) or unknown: stay conservative & safe.
    return 2 << 20, None, 1


def _choose_tiles(n_rows, length, itemsize, target_bytes, num_cores):
    """Pick (TILE_R, TILE_L): sublane-full, lane-dense (multiple of 128), and
    adaptive in both axes so the block approaches `target_bytes` even when
    B*C (rows) is small."""
    sub = max(8, 32 // max(itemsize, 1))        # 8 (f32) / 16 (bf16) / 32 (i8)
    rows_full = _round_up(max(n_rows, 1), sub)
    lanes_full = _round_up(max(length, 1), _LANE)

    # First pass: lane tile up to 2048, rows from the byte budget.
    tile_l = min(lanes_full, 2048)
    tile_r = max(target_bytes // (tile_l * itemsize), sub)
    tile_r = (tile_r // sub) * sub
    tile_r = min(tile_r, rows_full)

    # If the row count limited tile_r, grow tile_l (multiple of 128, may
    # exceed 2048) until the block reaches the byte target or spans all lanes.
    if tile_r * tile_l * itemsize < target_bytes and tile_l < lanes_full:
        tile_l = min(lanes_full,
                     max(_LANE,
                         _round_up(target_bytes // (tile_r * itemsize), _LANE)))

    # Megacore balance (v7x only): if the whole problem would be one tile,
    # split the lane axis so both TensorCores get work.
    if num_cores > 1:
        r_tiles = _cdiv(n_rows, tile_r)
        l_tiles = _cdiv(length, tile_l)
        if r_tiles == 1 and l_tiles == 1 and lanes_full > _LANE:
            tile_l = _round_up(_cdiv(lanes_full, 2), _LANE)

    return tile_r, tile_l


def normalizer_forward(x, mean, std, *, use_mean=True, use_scale=True,
                       min_bytes_for_pallas=1 << 20, target_block_bytes=None):
    """(x - mean) / std with per-channel params, as a Pallas TPU kernel."""
    B, C, L = x.shape
    assert mean.shape == (1, C, 1) and std.shape == (1, C, 1)

    if not use_mean and not use_scale:
        return x

    # Tiny problems: fused XLA beats kernel-launch + grid-step overhead.
    if x.size * x.dtype.itemsize < min_bytes_for_pallas:
        y = x
        if use_mean:
            y = y - mean.astype(x.dtype)
        if use_scale:
            y = y / std.astype(x.dtype)
        return y

    # Flatten (B, C) into the row (sublane) axis; expand params to per-row.
    R = B * C
    x2 = x.reshape(R, L)
    mean_r = jnp.tile(mean.reshape(C).astype(x.dtype), B).reshape(R, 1)
    # Reciprocal computed once, in f32, then cast: removes the per-tile divide
    # from the hot loop while keeping good numerics for low-precision inputs.
    inv_c = (1.0 / std.reshape(C).astype(jnp.float32)).astype(x.dtype)
    inv_r = jnp.tile(inv_c, B).reshape(R, 1)

    itemsize = x.dtype.itemsize
    chip_target, vmem_limit, num_cores = _chip_plan()
    target_bytes = chip_target if target_block_bytes is None else target_block_bytes
    tile_r, tile_l = _choose_tiles(R, L, itemsize, target_bytes, num_cores)

    # No explicit padding: ragged edge blocks are masked by Pallas.
    grid = (_cdiv(R, tile_r), _cdiv(L, tile_l))

    kernel = functools.partial(
        _normalizer_kernel, use_mean=use_mean, use_scale=use_scale)

    flops = (int(use_mean) + int(use_scale)) * R * L
    cost = pl.CostEstimate(
        flops=flops,
        transcendentals=0,
        bytes_accessed=2 * R * L * itemsize + 2 * R * itemsize)

    compiler_kwargs = dict(dimension_semantics=("parallel", "parallel"))
    if vmem_limit is not None:
        compiler_kwargs["vmem_limit_bytes"] = vmem_limit

    y2 = pl.pallas_call(
        kernel,
        out_shape=jax.ShapeDtypeStruct((R, L), x.dtype),
        grid_spec=pltpu.PrefetchScalarGridSpec(
            num_scalar_prefetch=0,
            grid=grid,
            in_specs=[
                pl.BlockSpec((tile_r, tile_l), lambda r, l: (r, l)),
                pl.BlockSpec((tile_r, 1), lambda r, l: (r, 0)),
                pl.BlockSpec((tile_r, 1), lambda r, l: (r, 0)),
            ],
            out_specs=pl.BlockSpec((tile_r, tile_l), lambda r, l: (r, l)),
        ),
        compiler_params=pltpu.CompilerParams(**compiler_kwargs),
        cost_estimate=cost,
    )(x2, mean_r, inv_r)

    # Reshape of a contiguous (R, L) array back to (B, C, L) is free.
    return y2.reshape(B, C, L)


if __name__ == "__main__":
    # TODO(synk): set_meanvariance (parameter fitting) is host-side state
    # management and not part of forward; only forward is implemented here.

    def _ref(x, mean, std, use_mean=True, use_scale=True):
        y = x
        if use_mean:
            y = y - mean
        if use_scale:
            y = y / std
        return y

    key = jax.random.PRNGKey(0)
    k1, k2, k3 = jax.random.split(key, 3)

    # 1) Small module-consistent shape (batch=2, channels=4, seq=16); force the
    #    Pallas path so the kernel itself is exercised.
    B, C, L = 2, 4, 16
    x = jax.random.normal(k1, (B, C, L), dtype=jnp.float32)
    mean = (jnp.arange(C, dtype=jnp.float32) * 0.25).reshape(1, C, 1)
    std = (1.0 + jnp.arange(C, dtype=jnp.float32) * 0.1).reshape(1, C, 1)

    out = jax.block_until_ready(
        normalizer_forward(x, mean, std, min_bytes_for_pallas=0))
    assert out.shape == x.shape and out.dtype == x.dtype
    assert jnp.allclose(out, _ref(x, mean, std), atol=1e-5, rtol=1e-5)

    # 2) Unaligned shape: exercises ragged (masked) edge blocks — no pad/slice.
    B2, C2, L2 = 3, 5, 4500
    x2 = jax.random.normal(k2, (B2, C2, L2), dtype=jnp.float32)
    mean2 = jax.random.normal(jax.random.PRNGKey(1), (1, C2, 1), dtype=jnp.float32)
    std2 = 0.5 + jax.random.uniform(jax.random.PRNGKey(2), (1, C2, 1),
                                    dtype=jnp.float32)
    out2 = jax.block_until_ready(
        normalizer_forward(x2, mean2, std2, min_bytes_for_pallas=0))
    assert jnp.allclose(out2, _ref(x2, mean2, std2), atol=1e-5, rtol=1e-5)

    # 3) Multi-tile grid in both axes (small block budget forces >1 tile),
    #    with ragged edges in both rows and lanes.
    B3, C3, L3 = 4, 6, 3000
    x3 = jax.random.normal(k3, (B3, C3, L3), dtype=jnp.float32)
    mean3 = jax.random.normal(jax.random.PRNGKey(3), (1, C3, 1), dtype=jnp.float32)
    std3 = 0.5 + jax.random.uniform(jax.random.PRNGKey(4), (1, C3, 1),
                                    dtype=jnp.float32)
    out3 = jax.block_until_ready(
        normalizer_forward(x3, mean3, std3, min_bytes_for_pallas=0,
                           target_block_bytes=32 << 10))
    assert jnp.allclose(out3, _ref(x3, mean3, std3), atol=1e-5, rtol=1e-5)

    # 4) Flag combinations.
    out4 = jax.block_until_ready(
        normalizer_forward(x, mean, std, use_scale=False, min_bytes_for_pallas=0))
    assert jnp.allclose(out4, _ref(x, mean, std, use_scale=False),
                        atol=1e-5, rtol=1e-5)
    out5 = jax.block_until_ready(
        normalizer_forward(x, mean, std, use_mean=False, min_bytes_for_pallas=0))
    assert jnp.allclose(out5, _ref(x, mean, std, use_mean=False),
                        atol=1e-5, rtol=1e-5)

    print("KERNEL_OK")
</pallas_src>

<mosaic_0001>
module attributes {stable_mosaic.version = 11 : i64} {
  func.func @_normalizer_kernel(%arg0: i32, %arg1: i32, %arg2: memref<8x128xf32, #tpu.memory_space<vmem>>, %arg3: memref<8x1xf32, #tpu.memory_space<vmem>>, %arg4: memref<8x1xf32, #tpu.memory_space<vmem>>, %arg5: memref<8x128xf32, #tpu.memory_space<vmem>>) attributes {dimension_semantics = [#tpu.dimension_semantics<parallel>, #tpu.dimension_semantics<parallel>], iteration_bounds = array<i64: 1, 1>, scalar_prefetch = 0 : i64, scratch_operands = 0 : i64, tpu.core_type = #tpu.core_type<tc>, window_params = [{transform_indices = @transform_0, window_bounds = array<i64: 8, 128>}, {transform_indices = @transform_1, window_bounds = array<i64: 8, 1>}, {transform_indices = @transform_2, window_bounds = array<i64: 8, 1>}, {transform_indices = @transform_3, window_bounds = array<i64: 8, 128>}]} {
    %c0 = arith.constant 0 : index
    %c0_0 = arith.constant 0 : index
    %0 = vector.load %arg2[%c0, %c0_0] : memref<8x128xf32, #tpu.memory_space<vmem>>, vector<8x128xf32>
    %c0_1 = arith.constant 0 : index
    %c0_2 = arith.constant 0 : index
    %1 = vector.load %arg3[%c0_1, %c0_2] : memref<8x1xf32, #tpu.memory_space<vmem>>, vector<8x1xf32>
    %2 = vector.broadcast %1 : vector<8x1xf32> to vector<8x128xf32>
    %3 = arith.subf %0, %2 : vector<8x128xf32>
    %c0_3 = arith.constant 0 : index
    %c0_4 = arith.constant 0 : index
    %4 = vector.load %arg4[%c0_3, %c0_4] : memref<8x1xf32, #tpu.memory_space<vmem>>, vector<8x1xf32>
    %5 = vector.broadcast %4 : vector<8x1xf32> to vector<8x128xf32>
    %6 = arith.mulf %3, %5 : vector<8x128xf32>
    %c0_5 = arith.constant 0 : index
    %c0_6 = arith.constant 0 : index
    %7 = vector.load %arg5[%c0_5, %c0_6] : memref<8x128xf32, #tpu.memory_space<vmem>>, vector<8x128xf32>
    tpu.vector_store %arg5[%c0_5, %c0_6], %6 {strides = array<i32>} : memref<8x128xf32, #tpu.memory_space<vmem>>, vector<8x128xf32>,
    return
  }
  func.func @transform_0(%arg0: i32, %arg1: i32) -> (i32, i32) {
    %c0_i32 = arith.constant 0 : i32
    return %arg0, %arg1 : i32, i32
  }
  func.func @transform_1(%arg0: i32, %arg1: i32) -> (i32, i32) {
    %c0_i32 = arith.constant 0 : i32
    %c0_i32_0 = arith.constant 0 : i32
    return %arg0, %c0_i32 : i32, i32
  }
  func.func @transform_2(%arg0: i32, %arg1: i32) -> (i32, i32) {
    %c0_i32 = arith.constant 0 : i32
    %c0_i32_0 = arith.constant 0 : i32
    return %arg0, %c0_i32 : i32, i32
  }
  func.func @transform_3(%arg0: i32, %arg1: i32) -> (i32, i32) {
    %c0_i32 = arith.constant 0 : i32
    return %arg0, %arg1 : i32, i32
  }
}

</mosaic_0001>

<llo_original>
// kernel: tpu_custom_call.1
$region0: #{tpu_custom_call.1}
  #allocation0 [shape = 'u32[]', space=smem, size = 0x4, offset = 0x4, fixed_abs, tag = 'smem constant byte address 0x4 - core index']
  #allocation1 [shape = 'u32[144,128]{1,0:T(1,128)}', space=vmem, size = 0x12000, scoped, tag = 'internal scratch']
  %s0 = inlined_call_operand.vmem [shape: f32[8,16], index: 0, kind: input, shape index: {}]
  %s1 = inlined_call_operand.vmem [shape: f32[8,1], index: 1, kind: input, shape index: {}]
  %s2 = inlined_call_operand.vmem [shape: f32[8,1], index: 2, kind: input, shape index: {}]
  %s3 = inlined_call_operand.hbm [shape: f32[8,16], index: 3, kind: output, shape index: {}]
  %s4 = sld [smem:[#allocation0]]
  $region22: #{tpu_custom_call.1} parent=0
    _
  %s6 = ssub.s32 1, %s4
  %s7 = scalar_select 0, %s6, %s4
  $region1: #{tpu_custom_call.1} parent=0
    #allocation2 [shape = 'u8[4096]{0}', space=vmem, size = 0x1000, scoped, tag = 'output window, operand 0, single buffered']
    #allocation3 [shape = 's32[1]{0}', space=sflag, size = 0x4, scoped, tag = 'scoped memory for tpu_custom_call.1']
    %8 = vsyncpa [#allocation3], 0
    // Predicated region
    $region2: #{tpu_custom_call.1} parent=1 // pred_check
      _
    $region3: #{tpu_custom_call.1} parent=1 // pred_check_branch
      %10 = sbr.rel (0) target = $region5
    $region4: #{tpu_custom_call.1} parent=1 // pred_region
      _
    $region5: #{tpu_custom_call.1} parent=1 // pred_fallthru
      _
    // Predicated region
    $region6: #{tpu_custom_call.1} parent=1 // pred_check
      _
    $region7: #{tpu_custom_call.1} parent=1 // pred_check_branch
      %12 = sbr.rel (0) target = $region9
    $region8: #{tpu_custom_call.1} parent=1 // pred_region
      _
    $region9: #{tpu_custom_call.1} parent=1 // pred_fallthru
      _
    // Predicated region
    $region10: #{tpu_custom_call.1} parent=1 // pred_check
      _
    $region11: #{tpu_custom_call.1} parent=1 // pred_check_branch
      %14 = sbr.rel (0) target = $region13
    $region12: #{tpu_custom_call.1} parent=1 // pred_region
      _
    $region13: #{tpu_custom_call.1} parent=1 // pred_fallthru
      _
    %v15 = vld [vmem:[%s0] sm:$0xff]
    %v16 = vld [vmem:[%s1] sm:$0xff]
    %18 = vset.pattern.permute.xlu0 0
    %19 = vperm.xlu0 %18, %v16
    %v20 = vpop.permute.xlu0 %19
    %v22 = vsub.f32 %v15, %v20
    %v23 = vld [vmem:[%s2] sm:$0xff]
    %25 = vset.pattern.permute.xlu0 0
    %26 = vperm.xlu0 %25, %v23
    %v27 = vpop.permute.xlu0 %26
    %v29 = vmul.f32 %v22, %v27
    %30 = vst [vmem:[#allocation2] sm:$0xff] %v29
    // Predicated region
    $region14: #{tpu_custom_call.1} parent=1 // pred_check
      _
    $region15: #{tpu_custom_call.1} parent=1 // pred_check_branch
      %32 = sbr.rel (0) target = $region17
    $region16: #{tpu_custom_call.1} parent=1 // pred_region
      %s34 = ssub.s32 128, 128
      %35 = vsyncadd [#allocation3], %s34
      %s37 = sshll.u32 [#allocation2], 4
      %s38 = int_to_ptr.vmem [resolvable:$true] %s37
      %40 = dma.vmem_to_hbm [thread:$0]  %s38, 128, %s3, [#allocation3]
    $region17: #{tpu_custom_call.1} parent=1 // pred_fallthru
      _
    // Predicated region
    $region18: #{tpu_custom_call.1} parent=1 // pred_check
      _
    $region19: #{tpu_custom_call.1} parent=1 // pred_check_branch
      %42 = sbr.rel (0) target = $region21
    $region20: #{tpu_custom_call.1} parent=1 // pred_region
      %43 = dma.done [#allocation3], 128
    $region21: #{tpu_custom_call.1} parent=1 // pred_fallthru
      _
    %44 = vsyncpa [#allocation3], 1

</llo_original>
